<compile_context>
chip_gen: v6e
topology: v6e:2x2x1
jax: 0.10.0
libtpu: 0.0.40
codegen_flags: <defaults>
</compile_context>

<pallas_src>
import jax
import jax.numpy as jnp
import numpy as np
from jax.experimental import pallas as pl
from jax.experimental.pallas import tpu as pltpu


def _resstack_kernel(x_ref, w1_ref, w2_ref, o_ref):
    """Whole problem in one invocation (no grid), everything VMEM-resident.

    x_ref:  (N, C, L)              activations in PyTorch NCL layout
    w1_ref: (num_layers, 3*C, R)   fused k=3 conv weights, rows ordered
                                   [tap0(C), tap1(C), tap2(C)], each tap.T
    w2_ref: (num_layers, R, C)     1x1 conv weights (torch w[:, :, 0].T)
    o_ref:  (N, C, L)              output, NCL layout
    """
    num_layers = w1_ref.shape[0]
    N, C, L = x_ref.shape
    NL = N * L

    # ---- NCL -> (N*L, C): per-batch 2-D XLU transpose + sublane concat ----
    # (N is small/static; 2-D minor transposes + sublane concat are the most
    #  robust layout ops in Mosaic, and they ride the XLU slot.)
    x = jnp.concatenate(
        [jnp.transpose(x_ref[n], (1, 0)) for n in range(N)], axis=0)  # (NL, C)

    # ---- batch-boundary masks (one lane column, broadcast in the where) ----
    # After flattening (N, L) -> N*L rows, the shifted conv taps must not leak
    # across batch elements; the first/last row of each window sees zero pad.
    row = jax.lax.broadcasted_iota(jnp.int32, (NL, 1), 0)
    is_first = row == 0
    is_last = row == (L - 1)
    for b in range(1, N):
        is_first = jnp.logical_or(is_first, row == b * L)
        is_last = jnp.logical_or(is_last, row == b * L + (L - 1))

    # NOTE: with many layers switch to lax.fori_loop(..., unroll=True) over the
    # stacked weight refs to bound live ranges; for 2 layers static unroll is fine.
    for layer in range(num_layers):
        h = jnp.maximum(x, 0.0)  # ReLU (VPU)

        # k=3, padding=1 conv: shifted copies via XLU roll + boundary mask,
        # then ONE fused matmul over the lane-concatenated (NL, 3C) operand.
        h_prev = jnp.where(is_first, 0.0, pltpu.roll(h, shift=1, axis=0))      # h[l-1]
        h_next = jnp.where(is_last, 0.0, pltpu.roll(h, shift=NL - 1, axis=0))  # h[l+1]
        h_cat = jnp.concatenate([h_prev, h, h_next], axis=-1)                  # (NL, 3C)

        # v5e: cast h_cat / r operands to bf16 here (f32 accumulation stays);
        # kept f32 for exact torch parity at 1e-5.
        r = jnp.maximum(
            jnp.dot(h_cat, w1_ref[layer], preferred_element_type=jnp.float32),
            0.0)                                                                # (NL, R)
        x = x + jnp.dot(r, w2_ref[layer], preferred_element_type=jnp.float32)   # (NL, C)

    y = jnp.maximum(x, 0.0)  # final F.relu of the stack

    # ---- (N*L, C) -> NCL store (layout epilogue inside the kernel) ----
    for n in range(N):
        o_ref[n] = jnp.transpose(y[n * L:(n + 1) * L, :], (1, 0)).astype(o_ref.dtype)


def imu_residual_stack(x_ncl, w1_flat, w2):
    """x_ncl: (N, C, L) like PyTorch; w1_flat: (layers, 3*C, R); w2: (layers, R, C).

    Returns (N, C, L). Gridless pallas_call: the whole problem is a few KiB and
    latency-bound, so one VMEM-resident invocation with no pipelining is best.
    """
    N, C, L = x_ncl.shape
    return pl.pallas_call(
        _resstack_kernel,
        out_shape=jax.ShapeDtypeStruct((N, C, L), x_ncl.dtype),
        in_specs=[
            pl.BlockSpec(memory_space=pltpu.MemorySpace.VMEM),
            pl.BlockSpec(memory_space=pltpu.MemorySpace.VMEM),
            pl.BlockSpec(memory_space=pltpu.MemorySpace.VMEM),
        ],
        out_specs=pl.BlockSpec(memory_space=pltpu.MemorySpace.VMEM),
    )(x_ncl, w1_flat, w2)


def _reference(x_ncl, w1_torch, w2_torch):
    """Pure-JAX reference with identical Conv1d(k=3, padding=1) semantics.

    Consumes the raw torch-layout weights (independent of the kernel layouts).
    w1_torch: (layers, R, C, 3); w2_torch: (layers, H, R, 1).
    """
    x = jnp.transpose(x_ncl, (0, 2, 1)).astype(jnp.float32)  # (N, L, C)
    N, L, C = x.shape
    num_layers = w1_torch.shape[0]
    zero = jnp.zeros((N, 1, C), jnp.float32)
    for layer in range(num_layers):
        h = jax.nn.relu(x)
        h_pad = jnp.concatenate([zero, h, zero], axis=1)      # (N, L+2, C)
        acc = jnp.zeros((N, L, w1_torch.shape[1]), jnp.float32)
        for k in range(3):
            acc = acc + jnp.einsum('nlc,rc->nlr', h_pad[:, k:k + L, :],
                                   w1_torch[layer, :, :, k].astype(jnp.float32))
        r = jax.nn.relu(acc)
        x = x + jnp.einsum('nlr,hr->nlh', r,
                           w2_torch[layer, :, :, 0].astype(jnp.float32))
    return jnp.transpose(jax.nn.relu(x), (0, 2, 1))


if __name__ == "__main__":
    # Module config: residual requires num_hiddens == in_channels.
    in_channels = 32
    num_hiddens = 32
    num_residual_layers = 2
    num_residual_hiddens = 8
    batch, length = 2, 16

    key = jax.random.PRNGKey(0)
    kx, k1, k2 = jax.random.split(key, 3)

    # Input in PyTorch NCL layout.
    x = jax.random.normal(kx, (batch, in_channels, length), dtype=jnp.float32)

    # Deterministic weights in torch layouts.
    # torch Conv1d(C, R, k=3) weight: (R, C, 3)
    w1_torch = 0.1 * jax.random.normal(
        k1, (num_residual_layers, num_residual_hiddens, in_channels, 3),
        dtype=jnp.float32)
    # torch Conv1d(R, H, k=1) weight: (H, R, 1)
    w2_torch = 0.1 * jax.random.normal(
        k2, (num_residual_layers, num_hiddens, num_residual_hiddens, 1),
        dtype=jnp.float32)

    # Host-side pre-fold into matmul-ready layouts (no in-kernel copies/casts):
    #   w1: (layers, R, C, 3) -> (layers, 3, C, R) -> (layers, 3*C, R)
    #       row index = tap*C + c, matching the [h_prev, h, h_next] lane concat.
    #   w2: (layers, H, R, 1) -> (layers, R, H)
    w1_flat = jnp.transpose(w1_torch, (0, 3, 2, 1)).reshape(
        num_residual_layers, 3 * in_channels, num_residual_hiddens)
    w2_mat = jnp.transpose(w2_torch[..., 0], (0, 2, 1))

    out = jax.block_until_ready(imu_residual_stack(x, w1_flat, w2_mat))
    ref = jax.block_until_ready(_reference(x, w1_torch, w2_torch))

    np.testing.assert_allclose(np.asarray(out), np.asarray(ref),
                               rtol=1e-5, atol=1e-5)
    assert out.shape == (batch, in_channels, length)
    print("KERNEL_OK")
</pallas_src>

<mosaic_0001>
module attributes {stable_mosaic.version = 11 : i64} {
  func.func @_resstack_kernel(%arg0: memref<2x32x16xf32, #tpu.memory_space<vmem>>, %arg1: memref<2x96x8xf32, #tpu.memory_space<vmem>>, %arg2: memref<2x8x32xf32, #tpu.memory_space<vmem>>, %arg3: memref<2x32x16xf32, #tpu.memory_space<vmem>>) attributes {dimension_semantics = [], scalar_prefetch = 0 : i64, scratch_operands = 0 : i64, tpu.core_type = #tpu.core_type<tc>} {
    %c0 = arith.constant 0 : index
    %c0_0 = arith.constant 0 : index
    %c0_1 = arith.constant 0 : index
    %0 = vector.load %arg0[%c0, %c0_0, %c0_1] : memref<2x32x16xf32, #tpu.memory_space<vmem>>, vector<1x32x16xf32>
    %1 = vector.shape_cast %0 : vector<1x32x16xf32> to vector<32x16xf32>
    %2 = tpu.transpose %1, [1, 0] : vector<32x16xf32> -> vector<16x32xf32>
    %c1 = arith.constant 1 : index
    %c0_2 = arith.constant 0 : index
    %c0_3 = arith.constant 0 : index
    %3 = vector.load %arg0[%c1, %c0_2, %c0_3] : memref<2x32x16xf32, #tpu.memory_space<vmem>>, vector<1x32x16xf32>
    %4 = vector.shape_cast %3 : vector<1x32x16xf32> to vector<32x16xf32>
    %5 = tpu.transpose %4, [1, 0] : vector<32x16xf32> -> vector<16x32xf32>
    %6 = tpu.concatenate %2, %5 in 0 : vector<16x32xf32>, vector<16x32xf32> -> vector<32x32xf32>
    %7 = tpu.iota {dimensions = array<i32: 0>} : vector<32x1xi32>
    %c0_i32 = arith.constant 0 : i32
    %8 = vector.broadcast %c0_i32 : i32 to vector<32x1xi32>
    %9 = arith.cmpi eq, %7, %8 : vector<32x1xi32>
    %c15_i32 = arith.constant 15 : i32
    %10 = vector.broadcast %c15_i32 : i32 to vector<32x1xi32>
    %11 = arith.cmpi eq, %7, %10 : vector<32x1xi32>
    %c16_i32 = arith.constant 16 : i32
    %12 = vector.broadcast %c16_i32 : i32 to vector<32x1xi32>
    %13 = arith.cmpi eq, %7, %12 : vector<32x1xi32>
    %14 = arith.ori %9, %13 : vector<32x1xi1>
    %c31_i32 = arith.constant 31 : i32
    %15 = vector.broadcast %c31_i32 : i32 to vector<32x1xi32>
    %16 = arith.cmpi eq, %7, %15 : vector<32x1xi32>
    %17 = arith.ori %11, %16 : vector<32x1xi1>
    %cst = arith.constant 0.000000e+00 : f32
    %18 = vector.broadcast %cst : f32 to vector<32x32xf32>
    %19 = arith.maximumf %6, %18 : vector<32x32xf32>
    %c1_i32 = arith.constant 1 : i32
    %20 = tpu.dynamic_rotate %19 by %c1_i32 dim 0 : vector<32x32xf32>, i32 -> vector<32x32xf32>
    %cst_4 = arith.constant 0.000000e+00 : f32
    %21 = vector.shape_cast %14 : vector<32x1xi1> to vector<32x1xi1>
    %22 = vector.broadcast %21 : vector<32x1xi1> to vector<32x32xi1>
    %23 = vector.broadcast %cst_4 : f32 to vector<32x32xf32>
    %24 = arith.select %22, %23, %20 : vector<32x32xi1>, vector<32x32xf32>
    %c31_i32_5 = arith.constant 31 : i32
    %25 = tpu.dynamic_rotate %19 by %c31_i32_5 dim 0 : vector<32x32xf32>, i32 -> vector<32x32xf32>
    %cst_6 = arith.constant 0.000000e+00 : f32
    %26 = vector.shape_cast %17 : vector<32x1xi1> to vector<32x1xi1>
    %27 = vector.broadcast %26 : vector<32x1xi1> to vector<32x32xi1>
    %28 = vector.broadcast %cst_6 : f32 to vector<32x32xf32>
    %29 = arith.select %27, %28, %25 : vector<32x32xi1>, vector<32x32xf32>
    %30 = tpu.concatenate %24, %19, %29 in 1 : vector<32x32xf32>, vector<32x32xf32>, vector<32x32xf32> -> vector<32x96xf32>
    %c0_7 = arith.constant 0 : index
    %c0_8 = arith.constant 0 : index
    %c0_9 = arith.constant 0 : index
    %31 = vector.load %arg1[%c0_7, %c0_8, %c0_9] : memref<2x96x8xf32, #tpu.memory_space<vmem>>, vector<1x96x8xf32>
    %32 = vector.shape_cast %31 : vector<1x96x8xf32> to vector<96x8xf32>
    %cst_10 = arith.constant dense<0.000000e+00> : vector<32x8xf32>
    %33 = tpu.matmul %30, %32, %cst_10 {dimension_numbers = #tpu.dot_dimension_numbers<[1], [0], [0], [1], [0, 0, 1, 1], [], []>} : vector<32x96xf32>, vector<96x8xf32>, vector<32x8xf32> -> vector<32x8xf32>
    %cst_11 = arith.constant 0.000000e+00 : f32
    %34 = vector.broadcast %cst_11 : f32 to vector<32x8xf32>
    %35 = arith.maximumf %33, %34 : vector<32x8xf32>
    %c0_12 = arith.constant 0 : index
    %c0_13 = arith.constant 0 : index
    %c0_14 = arith.constant 0 : index
    %36 = vector.load %arg2[%c0_12, %c0_13, %c0_14] : memref<2x8x32xf32, #tpu.memory_space<vmem>>, vector<1x8x32xf32>
    %37 = vector.shape_cast %36 : vector<1x8x32xf32> to vector<8x32xf32>
    %cst_15 = arith.constant dense<0.000000e+00> : vector<32x32xf32>
    %38 = tpu.matmul %35, %37, %cst_15 {dimension_numbers = #tpu.dot_dimension_numbers<[1], [0], [0], [1], [0, 0, 1, 1], [], []>} : vector<32x8xf32>, vector<8x32xf32>, vector<32x32xf32> -> vector<32x32xf32>
    %39 = arith.addf %6, %38 : vector<32x32xf32>
    %cst_16 = arith.constant 0.000000e+00 : f32
    %40 = vector.broadcast %cst_16 : f32 to vector<32x32xf32>
    %41 = arith.maximumf %39, %40 : vector<32x32xf32>
    %c1_i32_17 = arith.constant 1 : i32
    %42 = tpu.dynamic_rotate %41 by %c1_i32_17 dim 0 : vector<32x32xf32>, i32 -> vector<32x32xf32>
    %cst_18 = arith.constant 0.000000e+00 : f32
    %43 = vector.shape_cast %14 : vector<32x1xi1> to vector<32x1xi1>
    %44 = vector.broadcast %43 : vector<32x1xi1> to vector<32x32xi1>
    %45 = vector.broadcast %cst_18 : f32 to vector<32x32xf32>
    %46 = arith.select %44, %45, %42 : vector<32x32xi1>, vector<32x32xf32>
    %c31_i32_19 = arith.constant 31 : i32
    %47 = tpu.dynamic_rotate %41 by %c31_i32_19 dim 0 : vector<32x32xf32>, i32 -> vector<32x32xf32>
    %cst_20 = arith.constant 0.000000e+00 : f32
    %48 = vector.shape_cast %17 : vector<32x1xi1> to vector<32x1xi1>
    %49 = vector.broadcast %48 : vector<32x1xi1> to vector<32x32xi1>
    %50 = vector.broadcast %cst_20 : f32 to vector<32x32xf32>
    %51 = arith.select %49, %50, %47 : vector<32x32xi1>, vector<32x32xf32>
    %52 = tpu.concatenate %46, %41, %51 in 1 : vector<32x32xf32>, vector<32x32xf32>, vector<32x32xf32> -> vector<32x96xf32>
    %c1_21 = arith.constant 1 : index
    %c0_22 = arith.constant 0 : index
    %c0_23 = arith.constant 0 : index
    %53 = vector.load %arg1[%c1_21, %c0_22, %c0_23] : memref<2x96x8xf32, #tpu.memory_space<vmem>>, vector<1x96x8xf32>
    %54 = vector.shape_cast %53 : vector<1x96x8xf32> to vector<96x8xf32>
    %cst_24 = arith.constant dense<0.000000e+00> : vector<32x8xf32>
    %55 = tpu.matmul %52, %54, %cst_24 {dimension_numbers = #tpu.dot_dimension_numbers<[1], [0], [0], [1], [0, 0, 1, 1], [], []>} : vector<32x96xf32>, vector<96x8xf32>, vector<32x8xf32> -> vector<32x8xf32>
    %cst_25 = arith.constant 0.000000e+00 : f32
    %56 = vector.broadcast %cst_25 : f32 to vector<32x8xf32>
    %57 = arith.maximumf %55, %56 : vector<32x8xf32>
    %c1_26 = arith.constant 1 : index
    %c0_27 = arith.constant 0 : index
    %c0_28 = arith.constant 0 : index
    %58 = vector.load %arg2[%c1_26, %c0_27, %c0_28] : memref<2x8x32xf32, #tpu.memory_space<vmem>>, vector<1x8x32xf32>
    %59 = vector.shape_cast %58 : vector<1x8x32xf32> to vector<8x32xf32>
    %cst_29 = arith.constant dense<0.000000e+00> : vector<32x32xf32>
    %60 = tpu.matmul %57, %59, %cst_29 {dimension_numbers = #tpu.dot_dimension_numbers<[1], [0], [0], [1], [0, 0, 1, 1], [], []>} : vector<32x8xf32>, vector<8x32xf32>, vector<32x32xf32> -> vector<32x32xf32>
    %61 = arith.addf %39, %60 : vector<32x32xf32>
    %cst_30 = arith.constant 0.000000e+00 : f32
    %62 = vector.broadcast %cst_30 : f32 to vector<32x32xf32>
    %63 = arith.maximumf %61, %62 : vector<32x32xf32>
    %64 = vector.extract_strided_slice %63 {offsets = [0, 0], sizes = [16, 32], strides = [1, 1]} : vector<32x32xf32> to vector<16x32xf32>
    %65 = tpu.transpose %64, [1, 0] : vector<16x32xf32> -> vector<32x16xf32>
    %c0_31 = arith.constant 0 : index
    %c0_32 = arith.constant 0 : index
    %c0_33 = arith.constant 0 : index
    %66 = vector.load %arg3[%c0_31, %c0_32, %c0_33] : memref<2x32x16xf32, #tpu.memory_space<vmem>>, vector<1x32x16xf32>
    %67 = vector.shape_cast %66 : vector<1x32x16xf32> to vector<32x16xf32>
    %68 = vector.shape_cast %65 : vector<32x16xf32> to vector<1x32x16xf32>
    tpu.vector_store %arg3[%c0_31, %c0_32, %c0_33], %68 {strides = array<i32>} : memref<2x32x16xf32, #tpu.memory_space<vmem>>, vector<1x32x16xf32>,
    %69 = vector.extract_strided_slice %63 {offsets = [16, 0], sizes = [16, 32], strides = [1, 1]} : vector<32x32xf32> to vector<16x32xf32>
    %70 = tpu.transpose %69, [1, 0] : vector<16x32xf32> -> vector<32x16xf32>
    %c1_34 = arith.constant 1 : index
    %c0_35 = arith.constant 0 : index
    %c0_36 = arith.constant 0 : index
    %71 = vector.load %arg3[%c1_34, %c0_35, %c0_36] : memref<2x32x16xf32, #tpu.memory_space<vmem>>, vector<1x32x16xf32>
    %72 = vector.shape_cast %71 : vector<1x32x16xf32> to vector<32x16xf32>
    %73 = vector.shape_cast %70 : vector<32x16xf32> to vector<1x32x16xf32>
    tpu.vector_store %arg3[%c1_34, %c0_35, %c0_36], %73 {strides = array<i32>} : memref<2x32x16xf32, #tpu.memory_space<vmem>>, vector<1x32x16xf32>,
    return
  }
}

</mosaic_0001>

<llo_original>
// kernel: tpu_custom_call.1
$region0: #{tpu_custom_call.1}
  #allocation0 [shape = 'u32[]', space=smem, size = 0x4, offset = 0x4, fixed_abs, tag = 'smem constant byte address 0x4 - core index']
  #allocation1 [shape = 'u32[144,128]{1,0:T(1,128)}', space=vmem, size = 0x12000, scoped, tag = 'internal scratch']
  %s0 = inlined_call_operand.vmem [shape: f32[2,32,16], index: 0, kind: input, shape index: {}]
  %s1 = inlined_call_operand.vmem [shape: f32[2,96,8], index: 1, kind: input, shape index: {}]
  %s2 = inlined_call_operand.vmem [shape: f32[2,8,32], index: 2, kind: input, shape index: {}]
  %s3 = inlined_call_operand.vmem [shape: f32[2,32,16], index: 3, kind: output, shape index: {}]
  %s4 = sld [smem:[#allocation0]]
  $region22: #{tpu_custom_call.1} parent=0
    _
  %s6 = ssub.s32 1, %s4
  %s7 = scalar_select 0, %s6, %s4
  // Predicated region
  $region2: #{tpu_custom_call.1} parent=0 // pred_check
    _
  $region3: #{tpu_custom_call.1} parent=0 // pred_check_branch
    %9 = sbr.rel (0) target = $region5
  $region4: #{tpu_custom_call.1} parent=0 // pred_region
    _
  $region5: #{tpu_custom_call.1} parent=0 // pred_fallthru
    _
  // Predicated region
  $region6: #{tpu_custom_call.1} parent=0 // pred_check
    _
  $region7: #{tpu_custom_call.1} parent=0 // pred_check_branch
    %11 = sbr.rel (0) target = $region9
  $region8: #{tpu_custom_call.1} parent=0 // pred_region
    _
  $region9: #{tpu_custom_call.1} parent=0 // pred_fallthru
    _
  // Predicated region
  $region10: #{tpu_custom_call.1} parent=0 // pred_check
    _
  $region11: #{tpu_custom_call.1} parent=0 // pred_check_branch
    %13 = sbr.rel (0) target = $region13
  $region12: #{tpu_custom_call.1} parent=0 // pred_region
    _
  $region13: #{tpu_custom_call.1} parent=0 // pred_fallthru
    _
  %v14 = vld [vmem:[%s0] sm:$0xff]
  %v15 = vld [vmem:[%s0 + $0x8] sm:$0xff]
  %v16 = vld [vmem:[%s0 + $0x10] sm:$0xff]
  %v17 = vld [vmem:[%s0 + $0x18] sm:$0xff]
  %18 = vxpose.xlu0.b32.start [1/16] %v14, 128
  %19 = vxpose.xlu0.b32.cont [2/16] %v15, 128
  %20 = vxpose.xlu0.b32.cont [3/16] %v16, 128
  %21 = vxpose.xlu0.b32.cont [4/16] %v17, 128
  %22 = vxpose.xlu0.b32.cont [5/16] 0.0, 128
  %23 = vxpose.xlu0.b32.cont [6/16] 0.0, 128
  %24 = vxpose.xlu0.b32.cont [7/16] 0.0, 128
  %25 = vxpose.xlu0.b32.cont [8/16] 0.0, 128
  %26 = vxpose.xlu0.b32.cont [9/16] 0.0, 128
  %27 = vxpose.xlu0.b32.cont [10/16] 0.0, 128
  %28 = vxpose.xlu0.b32.cont [11/16] 0.0, 128
  %29 = vxpose.xlu0.b32.cont [12/16] 0.0, 128
  %30 = vxpose.xlu0.b32.cont [13/16] 0.0, 128
  %31 = vxpose.xlu0.b32.cont [14/16] 0.0, 128
  %32 = vxpose.xlu0.b32.cont [15/16] 0.0, 128
  %33 = vxpose.xlu0.b32.end [16/16] 0.0, 128
  %v34 = vpop.trf.xlu0
  %v35 = vpop.trf.xlu0
  %v36 = vpop.trf.xlu0
  %v37 = vpop.trf.xlu0
  %v38 = vpop.trf.xlu0
  %v39 = vpop.trf.xlu0
  %v40 = vpop.trf.xlu0
  %v41 = vpop.trf.xlu0
  %v42 = vpop.trf.xlu0
  %v43 = vpop.trf.xlu0
  %v44 = vpop.trf.xlu0
  %v45 = vpop.trf.xlu0
  %v46 = vpop.trf.xlu0
  %v47 = vpop.trf.xlu0
  %v48 = vpop.trf.xlu0
  %v49 = vpop.trf.xlu0
  %s50 = scalar_lea.vmem %s0, 32
  %v51 = vld [vmem:[%s50] sm:$0xff]
  %v52 = vld [vmem:[%s50 + $0x8] sm:$0xff]
  %v53 = vld [vmem:[%s50 + $0x10] sm:$0xff]
  %v54 = vld [vmem:[%s50 + $0x18] sm:$0xff]
  %55 = vxpose.xlu0.b32.start [1/16] %v51, 128
  %56 = vxpose.xlu0.b32.cont [2/16] %v52, 128
  %57 = vxpose.xlu0.b32.cont [3/16] %v53, 128
  %58 = vxpose.xlu0.b32.cont [4/16] %v54, 128
  %59 = vxpose.xlu0.b32.cont [5/16] 0.0, 128
  %60 = vxpose.xlu0.b32.cont [6/16] 0.0, 128
  %61 = vxpose.xlu0.b32.cont [7/16] 0.0, 128
  %62 = vxpose.xlu0.b32.cont [8/16] 0.0, 128
  %63 = vxpose.xlu0.b32.cont [9/16] 0.0, 128
  %64 = vxpose.xlu0.b32.cont [10/16] 0.0, 128
  %65 = vxpose.xlu0.b32.cont [11/16] 0.0, 128
  %66 = vxpose.xlu0.b32.cont [12/16] 0.0, 128
  %67 = vxpose.xlu0.b32.cont [13/16] 0.0, 128
  %68 = vxpose.xlu0.b32.cont [14/16] 0.0, 128
  %69 = vxpose.xlu0.b32.cont [15/16] 0.0, 128
  %70 = vxpose.xlu0.b32.end [16/16] 0.0, 128
  %v71 = vpop.trf.xlu0
  %v72 = vpop.trf.xlu0
  %v73 = vpop.trf.xlu0
  %v74 = vpop.trf.xlu0
  %v75 = vpop.trf.xlu0
  %v76 = vpop.trf.xlu0
  %v77 = vpop.trf.xlu0
  %v78 = vpop.trf.xlu0
  %v79 = vpop.trf.xlu0
  %v80 = vpop.trf.xlu0
  %v81 = vpop.trf.xlu0
  %v82 = vpop.trf.xlu0
  %v83 = vpop.trf.xlu0
  %v84 = vpop.trf.xlu0
  %v85 = vpop.trf.xlu0
  %v86 = vpop.trf.xlu0
  %v87 = vlaneseq
  %v88 = vshrl.u32 %v87, 7
  %v89 = vadd.s32 %v88, 8
  %v90 = vadd.s32 %v88, 16
  %v91 = vadd.s32 %v88, 24
  %vm92 = vcmp.eq.s32.totalorder %v88, 0
  %vm93 = vcmp.eq.s32.totalorder %v89, 0
  %vm94 = vcmp.eq.s32.totalorder %v90, 0
  %vm95 = vcmp.eq.s32.totalorder %v91, 0
  %vm96 = vcmp.eq.s32.totalorder %v88, 15
  %vm97 = vcmp.eq.s32.totalorder %v89, 15
  %vm98 = vcmp.eq.s32.totalorder %v90, 15
  %vm99 = vcmp.eq.s32.totalorder %v91, 15
  %vm100 = vcmp.eq.s32.totalorder %v88, 16
  %vm101 = vcmp.eq.s32.totalorder %v89, 16
  %vm102 = vcmp.eq.s32.totalorder %v90, 16
  %vm103 = vcmp.eq.s32.totalorder %v91, 16
  %vm104 = vmor %vm92, %vm100
  %vm105 = vmor %vm93, %vm101
  %vm106 = vmor %vm94, %vm102
  %vm107 = vmor %vm95, %vm103
  %vm108 = vcmp.eq.s32.totalorder %v88, 31
  %vm109 = vcmp.eq.s32.totalorder %v89, 31
  %vm110 = vcmp.eq.s32.totalorder %v90, 31
  %vm111 = vcmp.eq.s32.totalorder %v91, 31
  %vm112 = vmor %vm96, %vm108
  %vm113 = vmor %vm97, %vm109
  %vm114 = vmor %vm98, %vm110
  %vm115 = vmor %vm99, %vm111
  %v116 = vmax.f32 %v34, 0.0
  %v117 = vmax.f32 %v35, 0.0
  %v118 = vmax.f32 %v71, 0.0
  %v119 = vmax.f32 %v72, 0.0
  %v120 = vrot.slane %v116, 7
  %v121 = vrot.slane %v117, 7
  %v122 = vrot.slane %v118, 7
  %v123 = vrot.slane %v119, 7
  %vm124 = vcmp.lt.s32.totalorder %v88, 1
  %v125 = vsel %vm124, %v122, %v123
  %v126 = vsel %vm124, %v121, %v122
  %v127 = vsel %vm124, %v120, %v121
  %v128 = vsel %vm124, %v123, %v120
  %v129 = vsel %vm104, 1, 0
  %v130 = vsel %vm105, 1, 0
  %v131 = vsel %vm106, 1, 0
  %v132 = vsel %vm107, 1, 0
  %vm133 = vcmp.eq.s32.totalorder %v129, 1
  %vm134 = vcmp.eq.s32.totalorder %v130, 1
  %vm135 = vcmp.eq.s32.totalorder %v131, 1
  %vm136 = vcmp.eq.s32.totalorder %v132, 1
  %v137 = vsel %vm133, 0.0, %v128
  %v138 = vsel %vm134, 0.0, %v127
  %v139 = vsel %vm135, 0.0, %v126
  %v140 = vsel %vm136, 0.0, %v125
  %v141 = vrot.slane %v116, 1
  %v142 = vrot.slane %v117, 1
  %v143 = vrot.slane %v118, 1
  %v144 = vrot.slane %v119, 1
  %vm145 = vcmp.lt.s32.totalorder %v88, 7
  %v146 = vsel %vm145, %v143, %v144
  %v147 = vsel %vm145, %v142, %v143
  %v148 = vsel %vm145, %v141, %v142
  %v149 = vsel %vm145, %v144, %v141
  %v150 = vsel %vm112, 1, 0
  %v151 = vsel %vm113, 1, 0
  %v152 = vsel %vm114, 1, 0
  %v153 = vsel %vm115, 1, 0
  %vm154 = vcmp.eq.s32.totalorder %v150, 1
  %vm155 = vcmp.eq.s32.totalorder %v151, 1
  %vm156 = vcmp.eq.s32.totalorder %v152, 1
  %vm157 = vcmp.eq.s32.totalorder %v153, 1
  %v158 = vsel %vm154, 0.0, %v148
  %v159 = vsel %vm155, 0.0, %v147
  %v160 = vsel %vm156, 0.0, %v146
  %v161 = vsel %vm157, 0.0, %v149
  %166 = vrot.lane.b32.xlu0 %v116, 32
  %v167 = vpop.permute.xlu0 %166
  %168 = vrot.lane.b32.xlu0 %v117, 32
  %v169 = vpop.permute.xlu0 %168
  %170 = vrot.lane.b32.xlu0 %v118, 32
  %v171 = vpop.permute.xlu0 %170
  %172 = vrot.lane.b32.xlu0 %v119, 32
  %v173 = vpop.permute.xlu0 %172
  %182 = vrot.lane.b32.xlu0 %v158, 64
  %v183 = vpop.permute.xlu0 %182
  %184 = vrot.lane.b32.xlu0 %v159, 64
  %v185 = vpop.permute.xlu0 %184
  %186 = vrot.lane.b32.xlu0 %v160, 64
  %v187 = vpop.permute.xlu0 %186
  %188 = vrot.lane.b32.xlu0 %v161, 64
  %v189 = vpop.permute.xlu0 %188
  %vm194 = vcmask 261120
  %v195 = vsel %vm194, %v137, %v167
  %v196 = vsel %vm194, %v138, %v169
  %v197 = vsel %vm194, %v139, %v171
  %v198 = vsel %vm194, %v140, %v173
  %vm199 = vcmask 523264
  %v200 = vsel %vm199, %v195, %v183
  %v201 = vsel %vm199, %v196, %v185
  %v202 = vsel %vm199, %v197, %v187
  %v203 = vsel %vm199, %v198, %v189
  %v204 = vld [vmem:[%s1] sm:$0xff]
  %v205 = vld [vmem:[%s1 + $0x8] sm:$0xff]
  %v206 = vld [vmem:[%s1 + $0x10] sm:$0xff]
  %v207 = vld [vmem:[%s1 + $0x18] sm:$0xff]
  %v208 = vld [vmem:[%s1 + $0x20] sm:$0xff]
  %v209 = vld [vmem:[%s1 + $0x28] sm:$0xff]
  %v210 = vld [vmem:[%s1 + $0x30] sm:$0xff]
  %v211 = vld [vmem:[%s1 + $0x38] sm:$0xff]
  %v212 = vld [vmem:[%s1 + $0x40] sm:$0xff]
  %v213 = vld [vmem:[%s1 + $0x48] sm:$0xff]
  %v214 = vld [vmem:[%s1 + $0x50] sm:$0xff]
  %v215 = vld [vmem:[%s1 + $0x58] sm:$0xff]
  %vm216 = vcmask 785408
  %v218 = vsel %vm216, %v200, 0
  %v221 = vsel %vm216, %v201, 0
  %v224 = vsel %vm216, %v202, 0
  %v227 = vsel %vm216, %v203, 0
  %229 = vmatprep.subr.mxu0 0.0
  %230 = vmatpush1.msra.mxu0 0.0
  %231 = vmatprep.subr.mxu0 0.0
  %232 = vmatpush1.msra.mxu0 0.0
  %233 = vmatprep.subr.mxu0 0.0
  %234 = vmatpush1.msra.mxu0 0.0
  %235 = vmatprep.subr.mxu0 0.0
  %236 = vmatpush1.msra.mxu0 0.0
  %237 = vmatprep.subr.mxu0 0.0
  %238 = vmatpush1.msra.mxu0 %v215
  %239 = vmatprep.subr.mxu0 0.0
  %240 = vmatpush1.msra.mxu0 %v214
  %241 = vmatprep.subr.mxu0 0.0
  %242 = vmatpush1.msra.mxu0 %v213
  %243 = vmatprep.subr.mxu0 0.0
  %244 = vmatpush1.msra.mxu0 %v212
  %245 = vmatprep.subr.mxu0 0.0
  %246 = vmatpush1.msra.mxu0 %v211
  %247 = vmatprep.subr.mxu0 0.0
  %248 = vmatpush1.msra.mxu0 %v210
  %249 = vmatprep.subr.mxu0 0.0
  %250 = vmatpush1.msra.mxu0 %v209
  %251 = vmatprep.subr.mxu0 0.0
  %252 = vmatpush1.msra.mxu0 %v208
  %253 = vmatprep.subr.mxu0 0.0
  %254 = vmatpush1.msra.mxu0 %v207
  %255 = vmatprep.subr.mxu0 0.0
  %256 = vmatpush1.msra.mxu0 %v206
  %257 = vmatprep.subr.mxu0 0.0
  %258 = vmatpush1.msra.mxu0 %v205
  %259 = vmatprep.subr.mxu0 0.0
  %260 = vmatpush1.msra.mxu0 %v204
  %261 = vmatprep.subr.mxu0 0.0
  %262 = vmatpush2.msra.mxu0 0.0
  %263 = vmatprep.subr.mxu0 0.0
  %264 = vmatpush2.msra.mxu0 0.0
  %265 = vmatprep.subr.mxu0 0.0
  %266 = vmatpush2.msra.mxu0 0.0
  %267 = vmatprep.subr.mxu0 0.0
  %268 = vmatpush2.msra.mxu0 0.0
  %269 = vmatprep.subr.mxu0 0.0
  %270 = vmatpush2.msra.mxu0 0.0
  %271 = vmatprep.subr.mxu0 0.0
  %272 = vmatpush2.msra.mxu0 0.0
  %273 = vmatprep.subr.mxu0 0.0
  %274 = vmatpush2.msra.mxu0 0.0
  %275 = vmatprep.subr.mxu0 0.0
  %276 = vmatpush2.msra.mxu0 0.0
  %277 = vmatprep.subr.mxu0 0.0
  %278 = vmatpush2.msra.mxu0 0.0
  %279 = vmatprep.subr.mxu0 0.0
  %280 = vmatpush2.msra.mxu0 0.0
  %281 = vmatprep.subr.mxu0 0.0
  %282 = vmatpush2.msra.mxu0 0.0
  %283 = vmatprep.subr.mxu0 0.0
  %284 = vmatpush2.msra.mxu0 0.0
  %285 = vmatprep.subr.mxu0 0.0
  %286 = vmatpush2.msra.mxu0 0.0
  %287 = vmatprep.subr.mxu0 0.0
  %288 = vmatpush2.msra.mxu0 0.0
  %289 = vmatprep.subr.mxu0 0.0
  %290 = vmatpush2.msra.mxu0 0.0
  %291 = vmatprep.subr.mxu0 0.0
  %292 = vmatpush2.msra.mxu0 0.0
  %293 = vmatprep.mubr.f32.mxu0 0.0
  %294 = vmatmul.mubr.f32.gmra.mxu0 %v218
  %v295 = vpop.f32.mrf.mxu0
  %v296 = vadd.f32 0.0, %v295
  %v297 = vpop.f32.mrf.mxu0
  %298 = vmatprep.mubr.f32.mxu0 0.0
  %299 = vmatmul.mubr.f32.gmra.mxu0 %v221
  %v300 = vpop.f32.mrf.mxu0
  %v301 = vadd.f32 0.0, %v300
  %v302 = vpop.f32.mrf.mxu0
  %303 = vmatprep.mubr.f32.mxu0 0.0
  %304 = vmatmul.mubr.f32.gmra.mxu0 %v224
  %v305 = vpop.f32.mrf.mxu0
  %v306 = vadd.f32 0.0, %v305
  %v307 = vpop.f32.mrf.mxu0
  %308 = vmatprep.mubr.f32.mxu0 0.0
  %309 = vmatmul.mubr.f32.gmra.mxu0 %v227
  %v310 = vpop.f32.mrf.mxu0
  %v311 = vadd.f32 0.0, %v310
  %v312 = vpop.f32.mrf.mxu0
  %313 = vdwg.mxu0
  %v314 = vmax.f32 %v296, 0.0
  %v315 = vmax.f32 %v301, 0.0
  %v316 = vmax.f32 %v306, 0.0
  %v317 = vmax.f32 %v311, 0.0
  %v318 = vld [vmem:[%s2] sm:$0xff]
  %vm319 = vcmask 64512
  %v321 = vsel %vm319, %v314, 0
  %v324 = vsel %vm319, %v315, 0
  %v327 = vsel %vm319, %v316, 0
  %v330 = vsel %vm319, %v317, 0
  %332 = vmatprep.subr.mxu0 0.0
  %333 = vmatpush1.msra.mxu0 0.0
  %334 = vmatprep.subr.mxu0 0.0
  %335 = vmatpush1.msra.mxu0 0.0
  %336 = vmatprep.subr.mxu0 0.0
  %337 = vmatpush1.msra.mxu0 0.0
  %338 = vmatprep.subr.mxu0 0.0
  %339 = vmatpush1.msra.mxu0 0.0
  %340 = vmatprep.subr.mxu0 0.0
  %341 = vmatpush1.msra.mxu0 0.0
  %342 = vmatprep.subr.mxu0 0.0
  %343 = vmatpush1.msra.mxu0 0.0
  %344 = vmatprep.subr.mxu0 0.0
  %345 = vmatpush1.msra.mxu0 0.0
  %346 = vmatprep.subr.mxu0 0.0
  %347 = vmatpush1.msra.mxu0 0.0
  %348 = vmatprep.subr.mxu0 0.0
  %349 = vmatpush1.msra.mxu0 0.0
  %350 = vmatprep.subr.mxu0 0.0
  %351 = vmatpush1.msra.mxu0 0.0
  %352 = vmatprep.subr.mxu0 0.0
  %353 = vmatpush1.msra.mxu0 0.0
  %354 = vmatprep.subr.mxu0 0.0
  %355 = vmatpush1.msra.mxu0 0.0
  %356 = vmatprep.subr.mxu0 0.0
  %357 = vmatpush1.msra.mxu0 0.0
  %358 = vmatprep.subr.mxu0 0.0
  %359 = vmatpush1.msra.mxu0 0.0
  %360 = vmatprep.subr.mxu0 0.0
  %361 = vmatpush1.msra.mxu0 0.0
  %362 = vmatprep.subr.mxu0 0.0
  %363 = vmatpush1.msra.mxu0 %v318
  %364 = vmatprep.subr.mxu0 0.0
  %365 = vmatpush2.msra.mxu0 0.0
  %366 = vmatprep.subr.mxu0 0.0
  %367 = vmatpush2.msra.mxu0 0.0
  %368 = vmatprep.subr.mxu0 0.0
  %369 = vmatpush2.msra.mxu0 0.0
  %370 = vmatprep.subr.mxu0 0.0
  %371 = vmatpush2.msra.mxu0 0.0
  %372 = vmatprep.subr.mxu0 0.0
  %373 = vmatpush2.msra.mxu0 0.0
  %374 = vmatprep.subr.mxu0 0.0
  %375 = vmatpush2.msra.mxu0 0.0
  %376 = vmatprep.subr.mxu0 0.0
  %377 = vmatpush2.msra.mxu0 0.0
  %378 = vmatprep.subr.mxu0 0.0
  %379 = vmatpush2.msra.mxu0 0.0
  %380 = vmatprep.subr.mxu0 0.0
  %381 = vmatpush2.msra.mxu0 0.0
  %382 = vmatprep.subr.mxu0 0.0
  %383 = vmatpush2.msra.mxu0 0.0
  %384 = vmatprep.subr.mxu0 0.0
  %385 = vmatpush2.msra.mxu0 0.0
  %386 = vmatprep.subr.mxu0 0.0
  %387 = vmatpush2.msra.mxu0 0.0
  %388 = vmatprep.subr.mxu0 0.0
  %389 = vmatpush2.msra.mxu0 0.0
  %390 = vmatprep.subr.mxu0 0.0
  %391 = vmatpush2.msra.mxu0 0.0
  %392 = vmatprep.subr.mxu0 0.0
  %393 = vmatpush2.msra.mxu0 0.0
  %394 = vmatprep.subr.mxu0 0.0
  %395 = vmatpush2.msra.mxu0 0.0
  %396 = vmatprep.mubr.f32.mxu0 0.0
  %397 = vmatmul.mubr.f32.gmra.mxu0 %v321
  %v398 = vpop.f32.mrf.mxu0
  %v399 = vadd.f32 0.0, %v398
  %v400 = vpop.f32.mrf.mxu0
  %401 = vmatprep.mubr.f32.mxu0 0.0
  %402 = vmatmul.mubr.f32.gmra.mxu0 %v324
  %v403 = vpop.f32.mrf.mxu0
  %v404 = vadd.f32 0.0, %v403
  %v405 = vpop.f32.mrf.mxu0
  %406 = vmatprep.mubr.f32.mxu0 0.0
  %407 = vmatmul.mubr.f32.gmra.mxu0 %v327
  %v408 = vpop.f32.mrf.mxu0
  %v409 = vadd.f32 0.0, %v408
  %v410 = vpop.f32.mrf.mxu0
  %411 = vmatprep.mubr.f32.mxu0 0.0
  %412 = vmatmul.mubr.f32.gmra.mxu0 %v330
  %v413 = vpop.f32.mrf.mxu0
  %v414 = vadd.f32 0.0, %v413
  %v415 = vpop.f32.mrf.mxu0
  %416 = vdwg.mxu0
  %v417 = vadd.f32 %v34, %v399
  %v418 = vadd.f32 %v35, %v404
  %v419 = vadd.f32 %v71, %v409
  %v420 = vadd.f32 %v72, %v414
  %v421 = vmax.f32 %v417, 0.0
  %v422 = vmax.f32 %v418, 0.0
  %v423 = vmax.f32 %v419, 0.0
  %v424 = vmax.f32 %v420, 0.0
  %v425 = vrot.slane %v421, 7
  %v426 = vrot.slane %v422, 7
  %v427 = vrot.slane %v423, 7
  %v428 = vrot.slane %v424, 7
  %v429 = vsel %vm124, %v427, %v428
  %v430 = vsel %vm124, %v426, %v427
  %v431 = vsel %vm124, %v425, %v426
  %v432 = vsel %vm124, %v428, %v425
  %v433 = vsel %vm133, 0.0, %v432
  %v434 = vsel %vm134, 0.0, %v431
  %v435 = vsel %vm135, 0.0, %v430
  %v436 = vsel %vm136, 0.0, %v429
  %v437 = vrot.slane %v421, 1
  %v438 = vrot.slane %v422, 1
  %v439 = vrot.slane %v423, 1
  %v440 = vrot.slane %v424, 1
  %v441 = vsel %vm145, %v439, %v440
  %v442 = vsel %vm145, %v438, %v439
  %v443 = vsel %vm145, %v437, %v438
  %v444 = vsel %vm145, %v440, %v437
  %v445 = vsel %vm154, 0.0, %v443
  %v446 = vsel %vm155, 0.0, %v442
  %v447 = vsel %vm156, 0.0, %v441
  %v448 = vsel %vm157, 0.0, %v444
  %453 = vrot.lane.b32.xlu0 %v421, 32
  %v454 = vpop.permute.xlu0 %453
  %455 = vrot.lane.b32.xlu0 %v422, 32
  %v456 = vpop.permute.xlu0 %455
  %457 = vrot.lane.b32.xlu0 %v423, 32
  %v458 = vpop.permute.xlu0 %457
  %459 = vrot.lane.b32.xlu0 %v424, 32
  %v460 = vpop.permute.xlu0 %459
  %469 = vrot.lane.b32.xlu0 %v445, 64
  %v470 = vpop.permute.xlu0 %469
  %471 = vrot.lane.b32.xlu0 %v446, 64
  %v472 = vpop.permute.xlu0 %471
  %473 = vrot.lane.b32.xlu0 %v447, 64
  %v474 = vpop.permute.xlu0 %473
  %475 = vrot.lane.b32.xlu0 %v448, 64
  %v476 = vpop.permute.xlu0 %475
  %v481 = vsel %vm194, %v433, %v454
  %v482 = vsel %vm194, %v434, %v456
  %v483 = vsel %vm194, %v435, %v458
  %v484 = vsel %vm194, %v436, %v460
  %v485 = vsel %vm199, %v481, %v470
  %v486 = vsel %vm199, %v482, %v472
  %v487 = vsel %vm199, %v483, %v474
  %v488 = vsel %vm199, %v484, %v476
  %s489 = scalar_lea.vmem %s1, 96
  %v490 = vld [vmem:[%s489] sm:$0xff]
  %v491 = vld [vmem:[%s489 + $0x8] sm:$0xff]
  %v492 = vld [vmem:[%s489 + $0x10] sm:$0xff]
  %v493 = vld [vmem:[%s489 + $0x18] sm:$0xff]
  %v494 = vld [vmem:[%s489 + $0x20] sm:$0xff]
  %v495 = vld [vmem:[%s489 + $0x28] sm:$0xff]
  %v496 = vld [vmem:[%s489 + $0x30] sm:$0xff]
  %v497 = vld [vmem:[%s489 + $0x38] sm:$0xff]
  %v498 = vld [vmem:[%s489 + $0x40] sm:$0xff]
  %v499 = vld [vmem:[%s489 + $0x48] sm:$0xff]
  %v500 = vld [vmem:[%s489 + $0x50] sm:$0xff]
  %v501 = vld [vmem:[%s489 + $0x58] sm:$0xff]
  %v503 = vsel %vm216, %v485, 0
  %v506 = vsel %vm216, %v486, 0
  %v509 = vsel %vm216, %v487, 0
  %v512 = vsel %vm216, %v488, 0
  %514 = vmatprep.subr.mxu0 0.0
  %515 = vmatpush1.msra.mxu0 0.0
  %516 = vmatprep.subr.mxu0 0.0
  %517 = vmatpush1.msra.mxu0 0.0
  %518 = vmatprep.subr.mxu0 0.0
  %519 = vmatpush1.msra.mxu0 0.0
  %520 = vmatprep.subr.mxu0 0.0
  %521 = vmatpush1.msra.mxu0 0.0
  %522 = vmatprep.subr.mxu0 0.0
  %523 = vmatpush1.msra.mxu0 %v501
  %524 = vmatprep.subr.mxu0 0.0
  %525 = vmatpush1.msra.mxu0 %v500
  %526 = vmatprep.subr.mxu0 0.0
  %527 = vmatpush1.msra.mxu0 %v499
  %528 = vmatprep.subr.mxu0 0.0
  %529 = vmatpush1.msra.mxu0 %v498
  %530 = vmatprep.subr.mxu0 0.0
  %531 = vmatpush1.msra.mxu0 %v497
  %532 = vmatprep.subr.mxu0 0.0
  %533 = vmatpush1.msra.mxu0 %v496
  %534 = vmatprep.subr.mxu0 0.0
  %535 = vmatpush1.msra.mxu0 %v495
  %536 = vmatprep.subr.mxu0 0.0
  %537 = vmatpush1.msra.mxu0 %v494
  %538 = vmatprep.subr.mxu0 0.0
  %539 = vmatpush1.msra.mxu0 %v493
  %540 = vmatprep.subr.mxu0 0.0
  %541 = vmatpush1.msra.mxu0 %v492
  %542 = vmatprep.subr.mxu0 0.0
  %543 = vmatpush1.msra.mxu0 %v491
  %544 = vmatprep.subr.mxu0 0.0
  %545 = vmatpush1.msra.mxu0 %v490
  %546 = vmatprep.subr.mxu0 0.0
  %547 = vmatpush2.msra.mxu0 0.0
  %548 = vmatprep.subr.mxu0 0.0
  %549 = vmatpush2.msra.mxu0 0.0
  %550 = vmatprep.subr.mxu0 0.0
  %551 = vmatpush2.msra.mxu0 0.0
  %552 = vmatprep.subr.mxu0 0.0
  %553 = vmatpush2.msra.mxu0 0.0
  %554 = vmatprep.subr.mxu0 0.0
  %555 = vmatpush2.msra.mxu0 0.0
  %556 = vmatprep.subr.mxu0 0.0
  %557 = vmatpush2.msra.mxu0 0.0
  %558 = vmatprep.subr.mxu0 0.0
  %559 = vmatpush2.msra.mxu0 0.0
  %560 = vmatprep.subr.mxu0 0.0
  %561 = vmatpush2.msra.mxu0 0.0
  %562 = vmatprep.subr.mxu0 0.0
  %563 = vmatpush2.msra.mxu0 0.0
  %564 = vmatprep.subr.mxu0 0.0
  %565 = vmatpush2.msra.mxu0 0.0
  %566 = vmatprep.subr.mxu0 0.0
  %567 = vmatpush2.msra.mxu0 0.0
  %568 = vmatprep.subr.mxu0 0.0
  %569 = vmatpush2.msra.mxu0 0.0
  %570 = vmatprep.subr.mxu0 0.0
  %571 = vmatpush2.msra.mxu0 0.0
  %572 = vmatprep.subr.mxu0 0.0
  %573 = vmatpush2.msra.mxu0 0.0
  %574 = vmatprep.subr.mxu0 0.0
  %575 = vmatpush2.msra.mxu0 0.0
  %576 = vmatprep.subr.mxu0 0.0
  %577 = vmatpush2.msra.mxu0 0.0
  %578 = vmatprep.mubr.f32.mxu0 0.0
  %579 = vmatmul.mubr.f32.gmra.mxu0 %v503
  %v580 = vpop.f32.mrf.mxu0
  %v581 = vadd.f32 0.0, %v580
  %v582 = vpop.f32.mrf.mxu0
  %583 = vmatprep.mubr.f32.mxu0 0.0
  %584 = vmatmul.mubr.f32.gmra.mxu0 %v506
  %v585 = vpop.f32.mrf.mxu0
  %v586 = vadd.f32 0.0, %v585
  %v587 = vpop.f32.mrf.mxu0
  %588 = vmatprep.mubr.f32.mxu0 0.0
  %589 = vmatmul.mubr.f32.gmra.mxu0 %v509
  %v590 = vpop.f32.mrf.mxu0
  %v591 = vadd.f32 0.0, %v590
  %v592 = vpop.f32.mrf.mxu0
  %593 = vmatprep.mubr.f32.mxu0 0.0
  %594 = vmatmul.mubr.f32.gmra.mxu0 %v512
  %v595 = vpop.f32.mrf.mxu0
  %v596 = vadd.f32 0.0, %v595
  %v597 = vpop.f32.mrf.mxu0
  %598 = vdwg.mxu0
  %v599 = vmax.f32 %v581, 0.0
  %v600 = vmax.f32 %v586, 0.0
  %v601 = vmax.f32 %v591, 0.0
  %v602 = vmax.f32 %v596, 0.0
  %s603 = scalar_lea.vmem %s2, 8
  %v604 = vld [vmem:[%s603] sm:$0xff]
  %v606 = vsel %vm319, %v599, 0
  %v609 = vsel %vm319, %v600, 0
  %v612 = vsel %vm319, %v601, 0
  %v615 = vsel %vm319, %v602, 0
  %617 = vmatprep.subr.mxu0 0.0
  %618 = vmatpush1.msra.mxu0 0.0
  %619 = vmatprep.subr.mxu0 0.0
  %620 = vmatpush1.msra.mxu0 0.0
  %621 = vmatprep.subr.mxu0 0.0
  %622 = vmatpush1.msra.mxu0 0.0
  %623 = vmatprep.subr.mxu0 0.0
  %624 = vmatpush1.msra.mxu0 0.0
  %625 = vmatprep.subr.mxu0 0.0
  %626 = vmatpush1.msra.mxu0 0.0
  %627 = vmatprep.subr.mxu0 0.0
  %628 = vmatpush1.msra.mxu0 0.0
  %629 = vmatprep.subr.mxu0 0.0
  %630 = vmatpush1.msra.mxu0 0.0
  %631 = vmatprep.subr.mxu0 0.0
  %632 = vmatpush1.msra.mxu0 0.0
  %633 = vmatprep.subr.mxu0 0.0
  %634 = vmatpush1.msra.mxu0 0.0
  %635 = vmatprep.subr.mxu0 0.0
  %636 = vmatpush1.msra.mxu0 0.0
  %637 = vmatprep.subr.mxu0 0.0
  %638 = vmatpush1.msra.mxu0 0.0
  %639 = vmatprep.subr.mxu0 0.0
  %640 = vmatpush1.msra.mxu0 0.0
  %641 = vmatprep.subr.mxu0 0.0
  %642 = vmatpush1.msra.mxu0 0.0
  %643 = vmatprep.subr.mxu0 0.0
  %644 = vmatpush1.msra.mxu0 0.0
  %645 = vmatprep.subr.mxu0 0.0
  %646 = vmatpush1.msra.mxu0 0.0
  %647 = vmatprep.subr.mxu0 0.0
  %648 = vmatpush1.msra.mxu0 %v604
  %649 = vmatprep.subr.mxu0 0.0
  %650 = vmatpush2.msra.mxu0 0.0
  %651 = vmatprep.subr.mxu0 0.0
  %652 = vmatpush2.msra.mxu0 0.0
  %653 = vmatprep.subr.mxu0 0.0
  %654 = vmatpush2.msra.mxu0 0.0
  %655 = vmatprep.subr.mxu0 0.0
  %656 = vmatpush2.msra.mxu0 0.0
  %657 = vmatprep.subr.mxu0 0.0
  %658 = vmatpush2.msra.mxu0 0.0
  %659 = vmatprep.subr.mxu0 0.0
  %660 = vmatpush2.msra.mxu0 0.0
  %661 = vmatprep.subr.mxu0 0.0
  %662 = vmatpush2.msra.mxu0 0.0
  %663 = vmatprep.subr.mxu0 0.0
  %664 = vmatpush2.msra.mxu0 0.0
  %665 = vmatprep.subr.mxu0 0.0
  %666 = vmatpush2.msra.mxu0 0.0
  %667 = vmatprep.subr.mxu0 0.0
  %668 = vmatpush2.msra.mxu0 0.0
  %669 = vmatprep.subr.mxu0 0.0
  %670 = vmatpush2.msra.mxu0 0.0
  %671 = vmatprep.subr.mxu0 0.0
  %672 = vmatpush2.msra.mxu0 0.0
  %673 = vmatprep.subr.mxu0 0.0
  %674 = vmatpush2.msra.mxu0 0.0
  %675 = vmatprep.subr.mxu0 0.0
  %676 = vmatpush2.msra.mxu0 0.0
  %677 = vmatprep.subr.mxu0 0.0
  %678 = vmatpush2.msra.mxu0 0.0
  %679 = vmatprep.subr.mxu0 0.0
  %680 = vmatpush2.msra.mxu0 0.0
  %681 = vmatprep.mubr.f32.mxu0 0.0
  %682 = vmatmul.mubr.f32.gmra.mxu0 %v606
  %v683 = vpop.f32.mrf.mxu0
  %v684 = vadd.f32 0.0, %v683
  %v685 = vpop.f32.mrf.mxu0
  %686 = vmatprep.mubr.f32.mxu0 0.0
  %687 = vmatmul.mubr.f32.gmra.mxu0 %v609
  %v688 = vpop.f32.mrf.mxu0
  %v689 = vadd.f32 0.0, %v688
  %v690 = vpop.f32.mrf.mxu0
  %691 = vmatprep.mubr.f32.mxu0 0.0
  %692 = vmatmul.mubr.f32.gmra.mxu0 %v612
  %v693 = vpop.f32.mrf.mxu0
  %v694 = vadd.f32 0.0, %v693
  %v695 = vpop.f32.mrf.mxu0
  %696 = vmatprep.mubr.f32.mxu0 0.0
  %697 = vmatmul.mubr.f32.gmra.mxu0 %v615
  %v698 = vpop.f32.mrf.mxu0
  %v699 = vadd.f32 0.0, %v698
  %v700 = vpop.f32.mrf.mxu0
  %701 = vdwg.mxu0
  %v702 = vadd.f32 %v417, %v684
  %v703 = vadd.f32 %v418, %v689
  %v704 = vadd.f32 %v419, %v694
  %v705 = vadd.f32 %v420, %v699
  %v706 = vmax.f32 %v702, 0.0
  %v707 = vmax.f32 %v703, 0.0
  %v708 = vmax.f32 %v704, 0.0
  %v709 = vmax.f32 %v705, 0.0
  %710 = vxpose.xlu0.b32.start [1/16] %v706, 128
  %711 = vxpose.xlu0.b32.cont [2/16] %v707, 128
  %712 = vxpose.xlu0.b32.cont [3/16] 0.0, 128
  %713 = vxpose.xlu0.b32.cont [4/16] 0.0, 128
  %714 = vxpose.xlu0.b32.cont [5/16] 0.0, 128
  %715 = vxpose.xlu0.b32.cont [6/16] 0.0, 128
  %716 = vxpose.xlu0.b32.cont [7/16] 0.0, 128
  %717 = vxpose.xlu0.b32.cont [8/16] 0.0, 128
  %718 = vxpose.xlu0.b32.cont [9/16] 0.0, 128
  %719 = vxpose.xlu0.b32.cont [10/16] 0.0, 128
  %720 = vxpose.xlu0.b32.cont [11/16] 0.0, 128
  %721 = vxpose.xlu0.b32.cont [12/16] 0.0, 128
  %722 = vxpose.xlu0.b32.cont [13/16] 0.0, 128
  %723 = vxpose.xlu0.b32.cont [14/16] 0.0, 128
  %724 = vxpose.xlu0.b32.cont [15/16] 0.0, 128
  %725 = vxpose.xlu0.b32.end [16/16] 0.0, 128
  %v726 = vpop.trf.xlu0
  %v727 = vpop.trf.xlu0
  %v728 = vpop.trf.xlu0
  %v729 = vpop.trf.xlu0
  %v730 = vpop.trf.xlu0
  %v731 = vpop.trf.xlu0
  %v732 = vpop.trf.xlu0
  %v733 = vpop.trf.xlu0
  %v734 = vpop.trf.xlu0
  %v735 = vpop.trf.xlu0
  %v736 = vpop.trf.xlu0
  %v737 = vpop.trf.xlu0
  %v738 = vpop.trf.xlu0
  %v739 = vpop.trf.xlu0
  %v740 = vpop.trf.xlu0
  %v741 = vpop.trf.xlu0
  %vm742 = vcmask 130048
  %743 = vst.msk [vmem:[%s3] sm:$0xff] %vm742, %v726
  %744 = vst.msk [vmem:[%s3 + $0x8] sm:$0xff] %vm742, %v727
  %745 = vst.msk [vmem:[%s3 + $0x10] sm:$0xff] %vm742, %v728
  %746 = vst.msk [vmem:[%s3 + $0x18] sm:$0xff] %vm742, %v729
  %747 = vxpose.xlu0.b32.start [1/16] %v708, 128
  %748 = vxpose.xlu0.b32.cont [2/16] %v709, 128
  %749 = vxpose.xlu0.b32.cont [3/16] 0.0, 128
  %750 = vxpose.xlu0.b32.cont [4/16] 0.0, 128
  %751 = vxpose.xlu0.b32.cont [5/16] 0.0, 128
  %752 = vxpose.xlu0.b32.cont [6/16] 0.0, 128
  %753 = vxpose.xlu0.b32.cont [7/16] 0.0, 128
  %754 = vxpose.xlu0.b32.cont [8/16] 0.0, 128
  %755 = vxpose.xlu0.b32.cont [9/16] 0.0, 128
  %756 = vxpose.xlu0.b32.cont [10/16] 0.0, 128
  %757 = vxpose.xlu0.b32.cont [11/16] 0.0, 128
  %758 = vxpose.xlu0.b32.cont [12/16] 0.0, 128
  %759 = vxpose.xlu0.b32.cont [13/16] 0.0, 128
  %760 = vxpose.xlu0.b32.cont [14/16] 0.0, 128
  %761 = vxpose.xlu0.b32.cont [15/16] 0.0, 128
  %762 = vxpose.xlu0.b32.end [16/16] 0.0, 128
  %v763 = vpop.trf.xlu0
  %v764 = vpop.trf.xlu0
  %v765 = vpop.trf.xlu0
  %v766 = vpop.trf.xlu0
  %v767 = vpop.trf.xlu0
  %v768 = vpop.trf.xlu0
  %v769 = vpop.trf.xlu0
  %v770 = vpop.trf.xlu0
  %v771 = vpop.trf.xlu0
  %v772 = vpop.trf.xlu0
  %v773 = vpop.trf.xlu0
  %v774 = vpop.trf.xlu0
  %v775 = vpop.trf.xlu0
  %v776 = vpop.trf.xlu0
  %v777 = vpop.trf.xlu0
  %v778 = vpop.trf.xlu0
  %s779 = scalar_lea.vmem %s3, 32
  %780 = vst.msk [vmem:[%s779] sm:$0xff] %vm742, %v763
  %781 = vst.msk [vmem:[%s779 + $0x8] sm:$0xff] %vm742, %v764
  %782 = vst.msk [vmem:[%s779 + $0x10] sm:$0xff] %vm742, %v765
  %783 = vst.msk [vmem:[%s779 + $0x18] sm:$0xff] %vm742, %v766
  // Predicated region
  $region14: #{tpu_custom_call.1} parent=0 // pred_check
    _
  $region15: #{tpu_custom_call.1} parent=0 // pred_check_branch
    %785 = sbr.rel (0) target = $region17
  $region16: #{tpu_custom_call.1} parent=0 // pred_region
    _
  $region17: #{tpu_custom_call.1} parent=0 // pred_fallthru
    _
  // Predicated region
  $region18: #{tpu_custom_call.1} parent=0 // pred_check
    _
  $region19: #{tpu_custom_call.1} parent=0 // pred_check_branch
    %787 = sbr.rel (0) target = $region21
  $region20: #{tpu_custom_call.1} parent=0 // pred_region
    _
  $region21: #{tpu_custom_call.1} parent=0 // pred_fallthru
    _

</llo_original>
